<compile_context>
chip_gen: v5e
topology: v5e:2x2
jax: 0.10.0
libtpu: 0.0.40
codegen_flags: <defaults>
</compile_context>

<pallas_src>
import functools

import jax
import jax.numpy as jnp
from jax import lax
from jax.experimental import pallas as pl
from jax.experimental.pallas import tpu as pltpu

BN_EPS = 1e-5


# ----------------------------------------------------------------------------
# Elementwise helpers (all built from ops with guaranteed Mosaic lowerings).
# ----------------------------------------------------------------------------
def _erf(x):
    # Abramowitz & Stegun 7.1.26 (|error| <= 1.5e-7): avoids depending on a
    # hardware erf lowering; exp() goes to the EUP, polynomial to the VPU.
    a1, a2, a3, a4, a5 = (0.254829592, -0.284496736, 1.421413741,
                          -1.453152027, 1.061405429)
    p = 0.3275911
    sgn = jnp.where(x >= 0.0, 1.0, -1.0)
    ax = jnp.abs(x)
    t = 1.0 / (1.0 + p * ax)
    poly = ((((a5 * t + a4) * t + a3) * t + a2) * t + a1) * t
    return sgn * (1.0 - poly * jnp.exp(-ax * ax))


def _gelu(x, approximate):
    if approximate:
        # tanh-approx GELU: moves the transcendental to the EUP slot (review:
        # the VALU saturates first on the tiled loop).  Perf-path only.
        c = 0.7978845608028654
        return 0.5 * x * (1.0 + jnp.tanh(c * (x + 0.044715 * x * x * x)))
    # nn.GELU() default: 0.5 * x * (1 + erf(x / sqrt(2)))
    return 0.5 * x * (1.0 + _erf(x * 0.7071067811865476))


def _gelu_bn_stage(y, hid, approximate):
    """GELU + training-mode BatchNorm1d normalization on columns [:hid].

    Residual column(s) [hid:] ride through untouched via a lane-masked select
    (no sub-lane-tile slice, no cross-lane add).  BN affine is folded into the
    *following* Linear by pack_params(), so only normalization happens here.
    """
    n, c = y.shape
    h = _gelu(y, approximate)
    inv_n = 1.0 / n
    mean = jnp.sum(h, axis=0, keepdims=True) * inv_n
    meansq = jnp.sum(h * h, axis=0, keepdims=True) * inv_n
    var = jnp.maximum(meansq - mean * mean, 0.0)          # one-pass var, clamped
    hn = (h - mean) * lax.rsqrt(var + BN_EPS)
    keep = lax.broadcasted_iota(jnp.int32, (1, c), 1) < hid
    return jnp.where(keep, hn, y)


# ----------------------------------------------------------------------------
# Single-block kernel: whole batch resident in VMEM (small / moderate N).
# ----------------------------------------------------------------------------
def _bottleneck_judge_kernel(x_ref, w1_ref, w2_ref, w3_ref, vecs_ref, out_ref,
                             *, hid, approximate):
    cdt = w1_ref.dtype
    x = x_ref[...].astype(cdt)          # cast in VMEM -> no extra HBM pass
    b1 = vecs_ref[0:1, :]               # [b1 | bd + b3 + be2@w3]
    b2 = vecs_ref[1:2, :]               # [b2 + be1@w2 | 0]

    y1 = jnp.dot(x, w1_ref[...], preferred_element_type=jnp.float32) + b1
    h1 = _gelu_bn_stage(y1, hid, approximate)
    y2 = jnp.dot(h1.astype(cdt), w2_ref[...],
                 preferred_element_type=jnp.float32) + b2
    h2 = _gelu_bn_stage(y2, hid, approximate)
    out = jnp.dot(h2.astype(cdt), w3_ref[...],
                  preferred_element_type=jnp.float32)
    out_ref[...] = out.astype(out_ref.dtype)


# ----------------------------------------------------------------------------
# N-tiled kernel: grid = (3 phases, N tiles), streamed (two-phase) BatchNorm.
#   phase 0: accumulate BN1 sum / sum-sq of GELU(x@W1) over all tiles
#   phase 1: finalize BN1 stats, accumulate BN2 sum / sum-sq
#   phase 2: finalize BN2 stats, emit the output tile
# ----------------------------------------------------------------------------
def _bottleneck_judge_tiled_kernel(x_ref, w1_ref, w2_ref, w3_ref, vecs_ref,
                                   out_ref, stats_ref, *, hid, n_rows,
                                   approximate):
    phase = pl.program_id(0)
    t = pl.program_id(1)
    cdt = w1_ref.dtype
    c = w1_ref.shape[1]
    inv_n = 1.0 / n_rows

    @pl.when((phase == 0) & (t == 0))
    def _init():
        stats_ref[...] = jnp.zeros_like(stats_ref)

    @pl.when((phase == 1) & (t == 0))
    def _finalize_bn1():
        mean = stats_ref[0:1, :] * inv_n
        var = jnp.maximum(stats_ref[1:2, :] * inv_n - mean * mean, 0.0)
        stats_ref[4:5, :] = mean
        stats_ref[5:6, :] = lax.rsqrt(var + BN_EPS)

    @pl.when((phase == 2) & (t == 0))
    def _finalize_bn2():
        mean = stats_ref[2:3, :] * inv_n
        var = jnp.maximum(stats_ref[3:4, :] * inv_n - mean * mean, 0.0)
        stats_ref[6:7, :] = mean
        stats_ref[7:8, :] = lax.rsqrt(var + BN_EPS)

    keep = lax.broadcasted_iota(jnp.int32, (1, c), 1) < hid
    x = x_ref[...].astype(cdt)
    b1 = vecs_ref[0:1, :]
    b2 = vecs_ref[1:2, :]

    y1 = jnp.dot(x, w1_ref[...], preferred_element_type=jnp.float32) + b1
    g1 = _gelu(y1, approximate)

    @pl.when(phase == 0)
    def _acc_bn1():
        stats_ref[0:1, :] += jnp.sum(g1, axis=0, keepdims=True)
        stats_ref[1:2, :] += jnp.sum(g1 * g1, axis=0, keepdims=True)

    @pl.when(phase < 2)
    def _placeholder_out():
        # Deterministic placeholder so the auto-pipelined writeback of this
        # (revisited) output block never copies uninitialized VMEM.
        out_ref[...] = jnp.zeros_like(out_ref)

    @pl.when(phase >= 1)
    def _rest():
        h1 = jnp.where(keep, (g1 - stats_ref[4:5, :]) * stats_ref[5:6, :], y1)
        y2 = jnp.dot(h1.astype(cdt), w2_ref[...],
                     preferred_element_type=jnp.float32) + b2
        g2 = _gelu(y2, approximate)

        @pl.when(phase == 1)
        def _acc_bn2():
            stats_ref[2:3, :] += jnp.sum(g2, axis=0, keepdims=True)
            stats_ref[3:4, :] += jnp.sum(g2 * g2, axis=0, keepdims=True)

        @pl.when(phase == 2)
        def _emit():
            h2 = jnp.where(keep, (g2 - stats_ref[6:7, :]) * stats_ref[7:8, :], y2)
            out = jnp.dot(h2.astype(cdt), w3_ref[...],
                          preferred_element_type=jnp.float32)
            out_ref[...] = out.astype(out_ref.dtype)


# ----------------------------------------------------------------------------
# Parameter packing: fold/fuse the 13 PyTorch parameters into 4 kernel arrays.
# ----------------------------------------------------------------------------
def pack_params(p, compute_dtype=jnp.bfloat16):
    """Fold BN affine into the following Linear and fuse the downsample path.

      * BN(z) @ W + b == z_norm @ (gamma[:,None] * W) + (beta @ W + b)   (exact)
      * The residual x@wd rides as extra columns of W1; identity blocks in
        W2/W3 pass it through, so out = h2n @ W3f + residual happens in the
        final MXU pass at lane 0.  Its bias plus b3 and be2@w3 become the bias
        of that residual column.
      * Weight matrices are stored in `compute_dtype` (bf16 feeds the MXU and
        halves weight DMA bytes); biases / BN math stay f32.
    """
    hid = p["w2"].shape[0]
    out = p["w3"].shape[1]
    c = hid + out

    w2f = p["g1"].reshape(hid, 1) * p["w2"]
    b2f = p["be1"] @ p["w2"] + p["b2"]                         # (1, hid)
    w3f = p["g2"].reshape(hid, 1) * p["w3"]
    tail = p["be2"] @ p["w3"] + p["b3"] + p["bd"]              # (1, out)

    w1aug = jnp.concatenate([p["w1"], p["wd"]], axis=1)        # (in, hid+out)
    w2aug = jnp.zeros((c, c), jnp.float32)
    w2aug = w2aug.at[:hid, :hid].set(w2f)
    w2aug = w2aug.at[hid:, hid:].set(jnp.eye(out, dtype=jnp.float32))
    w3aug = jnp.concatenate([w3f, jnp.eye(out, dtype=jnp.float32)], axis=0)

    row0 = jnp.concatenate([p["b1"], tail], axis=1)            # (1, hid+out)
    row1 = jnp.concatenate([b2f, jnp.zeros((1, out), jnp.float32)], axis=1)
    vecs = jnp.concatenate([row0, row1], axis=0)               # (2, hid+out)

    return dict(
        w1=w1aug.astype(compute_dtype),
        w2=w2aug.astype(compute_dtype),
        w3=w3aug.astype(compute_dtype),
        vecs=vecs.astype(jnp.float32),
    )


# ----------------------------------------------------------------------------
# Wrappers
# ----------------------------------------------------------------------------
def bottleneck_judge(x, packed, *, approximate_gelu=False):
    """Single fused block (whole batch resident in VMEM).

    x: (N, in_places) f32 (cast to the MXU dtype happens inside the kernel).
    packed: output of pack_params().
    """
    # TODO(synk): when this judge is invoked many times per step, stack the
    # invocations along a leading "parallel" grid axis and pack the (N, 1)
    # outputs lane-dense (>=128 wide) to amortize launch cost and replace
    # masked vst.msk stores with full vst.
    n_rows, in_places = x.shape
    c = packed["w1"].shape[1]
    out_places = packed["w3"].shape[1]
    hid = c - out_places

    kernel = functools.partial(_bottleneck_judge_kernel, hid=hid,
                               approximate=approximate_gelu)

    # Rough VMEM footprint: f32 x + a handful of live (N, C->128 lanes) f32
    # intermediates; only raise the scoped limit when the default would bind.
    lanes = max(((c + 127) // 128) * 128, 128)
    est = 4 * n_rows * (in_places + 6 * lanes) + (1 << 20)
    compiler_params = None
    if est > (24 << 20):
        # TODO(synk): past ~60 MiB use bottleneck_judge_tiled -- v7x only has
        # 64 MiB of physical VMEM, so the single-block path does not scale there.
        compiler_params = pltpu.CompilerParams(
            vmem_limit_bytes=min(2 * est, 100 << 20))

    vmem = pl.BlockSpec(memory_space=pltpu.MemorySpace.VMEM)
    return pl.pallas_call(
        kernel,
        out_shape=jax.ShapeDtypeStruct((n_rows, out_places), jnp.float32),
        in_specs=[vmem] * 5,
        out_specs=vmem,
        compiler_params=compiler_params,
    )(x, packed["w1"], packed["w2"], packed["w3"], packed["vecs"])


def bottleneck_judge_tiled(x, packed, *, tile_n=512, approximate_gelu=False):
    """N-tiled path with streamed (full-batch) BatchNorm for large batches.

    Grid = (3 phases, N // tile_n tiles).  The tile axis carries the cross-tile
    BN-statistic accumulation, so both grid axes are "arbitrary"; an independent
    batch-of-problems axis (stacking many judge calls) is the one that would be
    marked "parallel" to use v7x's two TensorCores.
    """
    n_rows, in_places = x.shape
    c = packed["w1"].shape[1]
    out_places = packed["w3"].shape[1]
    hid = c - out_places
    if n_rows % tile_n != 0:
        raise ValueError("tile_n must divide N (pad the batch or adjust tile_n)")
    num_tiles = n_rows // tile_n

    kernel = functools.partial(_bottleneck_judge_tiled_kernel, hid=hid,
                               n_rows=n_rows, approximate=approximate_gelu)

    grid_spec = pltpu.PrefetchScalarGridSpec(
        num_scalar_prefetch=0,
        grid=(3, num_tiles),
        in_specs=[
            pl.BlockSpec((tile_n, in_places), lambda p, t: (t, 0)),
            pl.BlockSpec((in_places, c), lambda p, t: (0, 0)),
            pl.BlockSpec((c, c), lambda p, t: (0, 0)),
            pl.BlockSpec((c, out_places), lambda p, t: (0, 0)),
            pl.BlockSpec((2, c), lambda p, t: (0, 0)),
        ],
        out_specs=pl.BlockSpec((tile_n, out_places), lambda p, t: (t, 0)),
        scratch_shapes=[pltpu.VMEM((8, c), jnp.float32)],   # BN sum/sumsq/mean/rstd
    )
    return pl.pallas_call(
        kernel,
        out_shape=jax.ShapeDtypeStruct((n_rows, out_places), jnp.float32),
        grid_spec=grid_spec,
        compiler_params=pltpu.CompilerParams(
            dimension_semantics=("arbitrary", "arbitrary"),
            vmem_limit_bytes=48 << 20,   # explicit: safe on 64 MiB v7x VMEM
        ),
    )(x, packed["w1"], packed["w2"], packed["w3"], packed["vecs"])


# ----------------------------------------------------------------------------
# Deterministic synthetic parameters + pure-JAX reference (PyTorch semantics)
# ----------------------------------------------------------------------------
def init_params(key, in_places, hidden_places, out_places=1):
    ks = jax.random.split(key, 12)

    def lin(kw, kb, fan_in, fan_out):
        bound = 1.0 / jnp.sqrt(fan_in)
        w = jax.random.uniform(kw, (fan_in, fan_out), jnp.float32, -bound, bound)
        b = jax.random.uniform(kb, (1, fan_out), jnp.float32, -bound, bound)
        return w, b

    w1, b1 = lin(ks[0], ks[1], in_places, hidden_places)
    w2, b2 = lin(ks[2], ks[3], hidden_places, hidden_places)
    w3, b3 = lin(ks[4], ks[5], hidden_places, out_places)
    wd, bd = lin(ks[6], ks[7], in_places, out_places)

    # PyTorch BatchNorm1d default init is weight=1, bias=0; perturb so the
    # folded-affine path is actually exercised (reference uses the same values).
    g1 = 1.0 + 0.1 * jax.random.normal(ks[8], (1, hidden_places), jnp.float32)
    be1 = 0.1 * jax.random.normal(ks[9], (1, hidden_places), jnp.float32)
    g2 = 1.0 + 0.1 * jax.random.normal(ks[10], (1, hidden_places), jnp.float32)
    be2 = 0.1 * jax.random.normal(ks[11], (1, hidden_places), jnp.float32)

    return dict(w1=w1, b1=b1, g1=g1, be1=be1,
                w2=w2, b2=b2, g2=g2, be2=be2,
                w3=w3, b3=b3, wd=wd, bd=bd)


def reference(x, p):
    """Pure-JAX reference mirroring the PyTorch forward (training-mode BN)."""
    def bn(h, g, b):
        m = jnp.mean(h, axis=0, keepdims=True)
        v = jnp.mean((h - m) ** 2, axis=0, keepdims=True)
        return (h - m) / jnp.sqrt(v + BN_EPS) * g + b

    gelu = lambda t: 0.5 * t * (1.0 + lax.erf(t / jnp.sqrt(2.0)))
    h = bn(gelu(x @ p["w1"] + p["b1"]), p["g1"], p["be1"])
    h = bn(gelu(h @ p["w2"] + p["b2"]), p["g2"], p["be2"])
    out = h @ p["w3"] + p["b3"]
    return out + (x @ p["wd"] + p["bd"])


if __name__ == "__main__":
    IN, HID, OUT = 32, 64, 1
    key = jax.random.PRNGKey(0)
    kx, kp, kx2 = jax.random.split(key, 3)
    params = init_params(kp, IN, HID, OUT)

    # ---- small batch: single fused block -----------------------------------
    N = 8
    x = jax.random.normal(kx, (N, IN), jnp.float32)
    ref = reference(x, params)

    out_f32 = jax.block_until_ready(
        bottleneck_judge(x, pack_params(params, jnp.float32)))
    assert out_f32.shape == (N, OUT)
    assert jnp.allclose(out_f32, ref, rtol=1e-4, atol=1e-4)

    out_bf16 = jax.block_until_ready(
        bottleneck_judge(x, pack_params(params, jnp.bfloat16)))
    assert out_bf16.shape == (N, OUT)
    assert jnp.allclose(out_bf16, ref, rtol=5e-2, atol=5e-2)

    # ---- larger batch: N-tiled grid with streamed full-batch BatchNorm -----
    NB, TILE = 1024, 256
    xb = jax.random.normal(kx2, (NB, IN), jnp.float32)
    refb = reference(xb, params)

    out_tiled = jax.block_until_ready(
        bottleneck_judge_tiled(xb, pack_params(params, jnp.float32),
                               tile_n=TILE))
    assert out_tiled.shape == (NB, OUT)
    assert jnp.allclose(out_tiled, refb, rtol=1e-3, atol=1e-3)

    # Perf default for large N: bf16 MXU feed + tanh-approx GELU (EUP slot);
    # looser tolerance since both deliberately trade exactness for speed.
    out_fast = jax.block_until_ready(
        bottleneck_judge_tiled(xb, pack_params(params, jnp.bfloat16),
                               tile_n=TILE, approximate_gelu=True))
    assert jnp.allclose(out_fast, refb, rtol=1e-1, atol=1e-1)

    print("KERNEL_OK")
</pallas_src>

<mosaic_0001>
module attributes {stable_mosaic.version = 11 : i64} {
  func.func @_bottleneck_judge_kernel(%arg0: memref<8x32xf32, #tpu.memory_space<vmem>>, %arg1: memref<32x65xf32, #tpu.memory_space<vmem>>, %arg2: memref<65x65xf32, #tpu.memory_space<vmem>>, %arg3: memref<65x1xf32, #tpu.memory_space<vmem>>, %arg4: memref<2x65xf32, #tpu.memory_space<vmem>>, %arg5: memref<8x1xf32, #tpu.memory_space<vmem>>) attributes {dimension_semantics = [], scalar_prefetch = 0 : i64, scratch_operands = 0 : i64, tpu.core_type = #tpu.core_type<tc>} {
    %c0 = arith.constant 0 : index
    %c0_0 = arith.constant 0 : index
    %0 = vector.load %arg0[%c0, %c0_0] : memref<8x32xf32, #tpu.memory_space<vmem>>, vector<8x32xf32>
    %c0_1 = arith.constant 0 : index
    %c0_2 = arith.constant 0 : index
    %1 = vector.load %arg4[%c0_1, %c0_2] : memref<2x65xf32, #tpu.memory_space<vmem>>, vector<1x65xf32>
    %c1 = arith.constant 1 : index
    %c0_3 = arith.constant 0 : index
    %2 = vector.load %arg4[%c1, %c0_3] : memref<2x65xf32, #tpu.memory_space<vmem>>, vector<1x65xf32>
    %c0_4 = arith.constant 0 : index
    %c0_5 = arith.constant 0 : index
    %3 = vector.load %arg1[%c0_4, %c0_5] : memref<32x65xf32, #tpu.memory_space<vmem>>, vector<32x65xf32>
    %cst = arith.constant dense<0.000000e+00> : vector<8x65xf32>
    %4 = tpu.matmul %0, %3, %cst {dimension_numbers = #tpu.dot_dimension_numbers<[1], [0], [0], [1], [0, 0, 1, 1], [], []>} : vector<8x32xf32>, vector<32x65xf32>, vector<8x65xf32> -> vector<8x65xf32>
    %5 = vector.broadcast %1 : vector<1x65xf32> to vector<8x65xf32>
    %6 = arith.addf %4, %5 : vector<8x65xf32>
    %cst_6 = arith.constant 5.000000e-01 : f32
    %7 = vector.broadcast %cst_6 : f32 to vector<8x65xf32>
    %8 = arith.mulf %7, %6 : vector<8x65xf32>
    %cst_7 = arith.constant 0.707106769 : f32
    %9 = vector.broadcast %cst_7 : f32 to vector<8x65xf32>
    %10 = arith.mulf %6, %9 : vector<8x65xf32>
    %cst_8 = arith.constant 0.000000e+00 : f32
    %11 = vector.broadcast %cst_8 : f32 to vector<8x65xf32>
    %12 = arith.cmpf oge, %10, %11 : vector<8x65xf32>
    %cst_9 = arith.constant 1.000000e+00 : f32
    %cst_10 = arith.constant -1.000000e+00 : f32
    %13 = vector.broadcast %cst_9 : f32 to vector<8x65xf32>
    %14 = vector.broadcast %cst_10 : f32 to vector<8x65xf32>
    %15 = arith.select %12, %13, %14 : vector<8x65xi1>, vector<8x65xf32>
    %16 = math.absf %10 : vector<8x65xf32>
    %cst_11 = arith.constant 0.327591091 : f32
    %17 = vector.broadcast %cst_11 : f32 to vector<8x65xf32>
    %18 = arith.mulf %17, %16 : vector<8x65xf32>
    %cst_12 = arith.constant 1.000000e+00 : f32
    %19 = vector.broadcast %cst_12 : f32 to vector<8x65xf32>
    %20 = arith.addf %19, %18 : vector<8x65xf32>
    %cst_13 = arith.constant 1.000000e+00 : f32
    %21 = vector.broadcast %cst_13 : f32 to vector<8x65xf32>
    %22 = arith.divf %21, %20 : vector<8x65xf32>
    %cst_14 = arith.constant 1.06140542 : f32
    %23 = vector.broadcast %cst_14 : f32 to vector<8x65xf32>
    %24 = arith.mulf %23, %22 : vector<8x65xf32>
    %cst_15 = arith.constant -1.45315206 : f32
    %25 = vector.broadcast %cst_15 : f32 to vector<8x65xf32>
    %26 = arith.addf %24, %25 : vector<8x65xf32>
    %27 = arith.mulf %26, %22 : vector<8x65xf32>
    %cst_16 = arith.constant 1.42141378 : f32
    %28 = vector.broadcast %cst_16 : f32 to vector<8x65xf32>
    %29 = arith.addf %27, %28 : vector<8x65xf32>
    %30 = arith.mulf %29, %22 : vector<8x65xf32>
    %cst_17 = arith.constant -0.284496725 : f32
    %31 = vector.broadcast %cst_17 : f32 to vector<8x65xf32>
    %32 = arith.addf %30, %31 : vector<8x65xf32>
    %33 = arith.mulf %32, %22 : vector<8x65xf32>
    %cst_18 = arith.constant 0.254829586 : f32
    %34 = vector.broadcast %cst_18 : f32 to vector<8x65xf32>
    %35 = arith.addf %33, %34 : vector<8x65xf32>
    %36 = arith.mulf %35, %22 : vector<8x65xf32>
    %cst_19 = arith.constant 0.000000e+00 : f32
    %37 = vector.broadcast %cst_19 : f32 to vector<8x65xf32>
    %38 = arith.subf %37, %16 : vector<8x65xf32>
    %39 = arith.mulf %38, %16 : vector<8x65xf32>
    %40 = math.exp %39 : vector<8x65xf32>
    %41 = arith.mulf %36, %40 : vector<8x65xf32>
    %cst_20 = arith.constant 1.000000e+00 : f32
    %42 = vector.broadcast %cst_20 : f32 to vector<8x65xf32>
    %43 = arith.subf %42, %41 : vector<8x65xf32>
    %44 = arith.mulf %15, %43 : vector<8x65xf32>
    %cst_21 = arith.constant 1.000000e+00 : f32
    %45 = vector.broadcast %cst_21 : f32 to vector<8x65xf32>
    %46 = arith.addf %45, %44 : vector<8x65xf32>
    %47 = arith.mulf %8, %46 : vector<8x65xf32>
    %cst_22 = arith.constant dense<0.000000e+00> : vector<65xf32>
    %48 = vector.multi_reduction <add>, %47, %cst_22 [0] : vector<8x65xf32> to vector<65xf32>
    %49 = vector.shape_cast %48 : vector<65xf32> to vector<1x65xf32>
    %cst_23 = arith.constant 1.250000e-01 : f32
    %50 = vector.broadcast %cst_23 : f32 to vector<1x65xf32>
    %51 = arith.mulf %49, %50 : vector<1x65xf32>
    %52 = arith.mulf %47, %47 : vector<8x65xf32>
    %cst_24 = arith.constant dense<0.000000e+00> : vector<65xf32>
    %53 = vector.multi_reduction <add>, %52, %cst_24 [0] : vector<8x65xf32> to vector<65xf32>
    %54 = vector.shape_cast %53 : vector<65xf32> to vector<1x65xf32>
    %cst_25 = arith.constant 1.250000e-01 : f32
    %55 = vector.broadcast %cst_25 : f32 to vector<1x65xf32>
    %56 = arith.mulf %54, %55 : vector<1x65xf32>
    %57 = arith.mulf %51, %51 : vector<1x65xf32>
    %58 = arith.subf %56, %57 : vector<1x65xf32>
    %cst_26 = arith.constant 0.000000e+00 : f32
    %59 = vector.broadcast %cst_26 : f32 to vector<1x65xf32>
    %60 = arith.maximumf %58, %59 : vector<1x65xf32>
    %61 = vector.broadcast %51 : vector<1x65xf32> to vector<8x65xf32>
    %62 = arith.subf %47, %61 : vector<8x65xf32>
    %cst_27 = arith.constant 9.99999974E-6 : f32
    %63 = vector.broadcast %cst_27 : f32 to vector<1x65xf32>
    %64 = arith.addf %60, %63 : vector<1x65xf32>
    %65 = math.rsqrt %64 : vector<1x65xf32>
    %66 = vector.broadcast %65 : vector<1x65xf32> to vector<8x65xf32>
    %67 = arith.mulf %62, %66 : vector<8x65xf32>
    %68 = tpu.iota {dimensions = array<i32: 1>} : vector<1x65xi32>
    %c64_i32 = arith.constant 64 : i32
    %69 = vector.broadcast %c64_i32 : i32 to vector<1x65xi32>
    %70 = arith.cmpi slt, %68, %69 : vector<1x65xi32>
    %71 = vector.shape_cast %70 : vector<1x65xi1> to vector<1x65xi1>
    %72 = vector.broadcast %71 : vector<1x65xi1> to vector<8x65xi1>
    %73 = arith.select %72, %67, %6 : vector<8x65xi1>, vector<8x65xf32>
    %c0_28 = arith.constant 0 : index
    %c0_29 = arith.constant 0 : index
    %74 = vector.load %arg2[%c0_28, %c0_29] : memref<65x65xf32, #tpu.memory_space<vmem>>, vector<65x65xf32>
    %cst_30 = arith.constant dense<0.000000e+00> : vector<8x65xf32>
    %75 = tpu.matmul %73, %74, %cst_30 {dimension_numbers = #tpu.dot_dimension_numbers<[1], [0], [0], [1], [0, 0, 1, 1], [], []>} : vector<8x65xf32>, vector<65x65xf32>, vector<8x65xf32> -> vector<8x65xf32>
    %76 = vector.broadcast %2 : vector<1x65xf32> to vector<8x65xf32>
    %77 = arith.addf %75, %76 : vector<8x65xf32>
    %cst_31 = arith.constant 5.000000e-01 : f32
    %78 = vector.broadcast %cst_31 : f32 to vector<8x65xf32>
    %79 = arith.mulf %78, %77 : vector<8x65xf32>
    %cst_32 = arith.constant 0.707106769 : f32
    %80 = vector.broadcast %cst_32 : f32 to vector<8x65xf32>
    %81 = arith.mulf %77, %80 : vector<8x65xf32>
    %cst_33 = arith.constant 0.000000e+00 : f32
    %82 = vector.broadcast %cst_33 : f32 to vector<8x65xf32>
    %83 = arith.cmpf oge, %81, %82 : vector<8x65xf32>
    %cst_34 = arith.constant 1.000000e+00 : f32
    %cst_35 = arith.constant -1.000000e+00 : f32
    %84 = vector.broadcast %cst_34 : f32 to vector<8x65xf32>
    %85 = vector.broadcast %cst_35 : f32 to vector<8x65xf32>
    %86 = arith.select %83, %84, %85 : vector<8x65xi1>, vector<8x65xf32>
    %87 = math.absf %81 : vector<8x65xf32>
    %cst_36 = arith.constant 0.327591091 : f32
    %88 = vector.broadcast %cst_36 : f32 to vector<8x65xf32>
    %89 = arith.mulf %88, %87 : vector<8x65xf32>
    %cst_37 = arith.constant 1.000000e+00 : f32
    %90 = vector.broadcast %cst_37 : f32 to vector<8x65xf32>
    %91 = arith.addf %90, %89 : vector<8x65xf32>
    %cst_38 = arith.constant 1.000000e+00 : f32
    %92 = vector.broadcast %cst_38 : f32 to vector<8x65xf32>
    %93 = arith.divf %92, %91 : vector<8x65xf32>
    %cst_39 = arith.constant 1.06140542 : f32
    %94 = vector.broadcast %cst_39 : f32 to vector<8x65xf32>
    %95 = arith.mulf %94, %93 : vector<8x65xf32>
    %cst_40 = arith.constant -1.45315206 : f32
    %96 = vector.broadcast %cst_40 : f32 to vector<8x65xf32>
    %97 = arith.addf %95, %96 : vector<8x65xf32>
    %98 = arith.mulf %97, %93 : vector<8x65xf32>
    %cst_41 = arith.constant 1.42141378 : f32
    %99 = vector.broadcast %cst_41 : f32 to vector<8x65xf32>
    %100 = arith.addf %98, %99 : vector<8x65xf32>
    %101 = arith.mulf %100, %93 : vector<8x65xf32>
    %cst_42 = arith.constant -0.284496725 : f32
    %102 = vector.broadcast %cst_42 : f32 to vector<8x65xf32>
    %103 = arith.addf %101, %102 : vector<8x65xf32>
    %104 = arith.mulf %103, %93 : vector<8x65xf32>
    %cst_43 = arith.constant 0.254829586 : f32
    %105 = vector.broadcast %cst_43 : f32 to vector<8x65xf32>
    %106 = arith.addf %104, %105 : vector<8x65xf32>
    %107 = arith.mulf %106, %93 : vector<8x65xf32>
    %cst_44 = arith.constant 0.000000e+00 : f32
    %108 = vector.broadcast %cst_44 : f32 to vector<8x65xf32>
    %109 = arith.subf %108, %87 : vector<8x65xf32>
    %110 = arith.mulf %109, %87 : vector<8x65xf32>
    %111 = math.exp %110 : vector<8x65xf32>
    %112 = arith.mulf %107, %111 : vector<8x65xf32>
    %cst_45 = arith.constant 1.000000e+00 : f32
    %113 = vector.broadcast %cst_45 : f32 to vector<8x65xf32>
    %114 = arith.subf %113, %112 : vector<8x65xf32>
    %115 = arith.mulf %86, %114 : vector<8x65xf32>
    %cst_46 = arith.constant 1.000000e+00 : f32
    %116 = vector.broadcast %cst_46 : f32 to vector<8x65xf32>
    %117 = arith.addf %116, %115 : vector<8x65xf32>
    %118 = arith.mulf %79, %117 : vector<8x65xf32>
    %cst_47 = arith.constant dense<0.000000e+00> : vector<65xf32>
    %119 = vector.multi_reduction <add>, %118, %cst_47 [0] : vector<8x65xf32> to vector<65xf32>
    %120 = vector.shape_cast %119 : vector<65xf32> to vector<1x65xf32>
    %cst_48 = arith.constant 1.250000e-01 : f32
    %121 = vector.broadcast %cst_48 : f32 to vector<1x65xf32>
    %122 = arith.mulf %120, %121 : vector<1x65xf32>
    %123 = arith.mulf %118, %118 : vector<8x65xf32>
    %cst_49 = arith.constant dense<0.000000e+00> : vector<65xf32>
    %124 = vector.multi_reduction <add>, %123, %cst_49 [0] : vector<8x65xf32> to vector<65xf32>
    %125 = vector.shape_cast %124 : vector<65xf32> to vector<1x65xf32>
    %cst_50 = arith.constant 1.250000e-01 : f32
    %126 = vector.broadcast %cst_50 : f32 to vector<1x65xf32>
    %127 = arith.mulf %125, %126 : vector<1x65xf32>
    %128 = arith.mulf %122, %122 : vector<1x65xf32>
    %129 = arith.subf %127, %128 : vector<1x65xf32>
    %cst_51 = arith.constant 0.000000e+00 : f32
    %130 = vector.broadcast %cst_51 : f32 to vector<1x65xf32>
    %131 = arith.maximumf %129, %130 : vector<1x65xf32>
    %132 = vector.broadcast %122 : vector<1x65xf32> to vector<8x65xf32>
    %133 = arith.subf %118, %132 : vector<8x65xf32>
    %cst_52 = arith.constant 9.99999974E-6 : f32
    %134 = vector.broadcast %cst_52 : f32 to vector<1x65xf32>
    %135 = arith.addf %131, %134 : vector<1x65xf32>
    %136 = math.rsqrt %135 : vector<1x65xf32>
    %137 = vector.broadcast %136 : vector<1x65xf32> to vector<8x65xf32>
    %138 = arith.mulf %133, %137 : vector<8x65xf32>
    %139 = tpu.iota {dimensions = array<i32: 1>} : vector<1x65xi32>
    %c64_i32_53 = arith.constant 64 : i32
    %140 = vector.broadcast %c64_i32_53 : i32 to vector<1x65xi32>
    %141 = arith.cmpi slt, %139, %140 : vector<1x65xi32>
    %142 = vector.shape_cast %141 : vector<1x65xi1> to vector<1x65xi1>
    %143 = vector.broadcast %142 : vector<1x65xi1> to vector<8x65xi1>
    %144 = arith.select %143, %138, %77 : vector<8x65xi1>, vector<8x65xf32>
    %c0_54 = arith.constant 0 : index
    %c0_55 = arith.constant 0 : index
    %145 = vector.load %arg3[%c0_54, %c0_55] : memref<65x1xf32, #tpu.memory_space<vmem>>, vector<65x1xf32>
    %cst_56 = arith.constant dense<0.000000e+00> : vector<8x1xf32>
    %146 = tpu.matmul %144, %145, %cst_56 {dimension_numbers = #tpu.dot_dimension_numbers<[1], [0], [0], [1], [0, 0, 1, 1], [], []>} : vector<8x65xf32>, vector<65x1xf32>, vector<8x1xf32> -> vector<8x1xf32>
    %c0_57 = arith.constant 0 : index
    %c0_58 = arith.constant 0 : index
    %147 = vector.load %arg5[%c0_57, %c0_58] : memref<8x1xf32, #tpu.memory_space<vmem>>, vector<8x1xf32>
    tpu.vector_store %arg5[%c0_57, %c0_58], %146 {strides = array<i32>} : memref<8x1xf32, #tpu.memory_space<vmem>>, vector<8x1xf32>,
    return
  }
}

</mosaic_0001>

<llo_original>
// kernel: tpu_custom_call.1
$region0: #{tpu_custom_call.1}
  #allocation0 [shape = 'u32[]', space=smem, size = 0x4, offset = 0x4, fixed_abs, tag = 'smem constant byte address 0x4 - core index']
  #allocation1 [shape = 'u32[72,128]{1,0:T(1,128)}', space=vmem, size = 0x9000, scoped, tag = 'internal scratch']
  %s0 = inlined_call_operand.hbm [shape: f32[8,32], index: 0, kind: input, shape index: {}]
  %s1 = inlined_call_operand.hbm [shape: f32[32,65], index: 1, kind: input, shape index: {}]
  %s2 = inlined_call_operand.vmem [shape: f32[65,65], index: 2, kind: input, shape index: {}]
  %s3 = inlined_call_operand.vmem [shape: f32[65,1], index: 3, kind: input, shape index: {}]
  %s4 = inlined_call_operand.vmem [shape: f32[2,65], index: 4, kind: input, shape index: {}]
  %s5 = inlined_call_operand.vmem [shape: f32[8,1], index: 5, kind: output, shape index: {}]
  %s6 = sld [smem:[#allocation0]]
  $region38: #{tpu_custom_call.1} parent=0
    _
  %s8 = ssub.s32 1, %s6
  %s9 = scalar_select 0, %s8, %s6
  $region1: #{tpu_custom_call.1} parent=0
    #allocation2 [shape = 'u8[4096]{0}', space=vmem, size = 0x1000, scoped, tag = 'input window, operand 0, single buffered']
    #allocation3 [shape = 's32[1]{0}', space=sflag, size = 0x4, scoped, tag = 'scoped memory for tpu_custom_call.1']
    #allocation4 [shape = 'u8[16384]{0}', space=vmem, size = 0x4000, scoped, tag = 'input window, operand 1, single buffered']
    #allocation5 [shape = 's32[1]{0}', space=sflag, size = 0x4, scoped, tag = 'scoped memory for tpu_custom_call.1']
    %10 = vsyncpa [#allocation3], 0
    %11 = vsyncpa [#allocation5], 0
    // Predicated region
    $region2: #{tpu_custom_call.1} parent=1 // pred_check
      _
    $region3: #{tpu_custom_call.1} parent=1 // pred_check_branch
      %13 = sbr.rel (0) target = $region5
    $region4: #{tpu_custom_call.1} parent=1 // pred_region
      %15 = vsyncadd [#allocation3], 0
      %s17 = sshll.u32 %s0, 4
      %s18 = int_to_ptr.hbm [resolvable:$true] %s17
      %s19 = sshll.u32 [#allocation2], 4
      %s20 = int_to_ptr.vmem [resolvable:$true] %s19
      %22 = dma.hbm_to_vmem [thread:$0]  %s18, 128, %s20, [#allocation3]
    $region5: #{tpu_custom_call.1} parent=1 // pred_fallthru
      _
    // Predicated region
    $region6: #{tpu_custom_call.1} parent=1 // pred_check
      _
    $region7: #{tpu_custom_call.1} parent=1 // pred_check_branch
      %24 = sbr.rel (0) target = $region9
    $region8: #{tpu_custom_call.1} parent=1 // pred_region
      %26 = vsyncadd [#allocation5], 0
      %s27 = sshll.u32 %s1, 4
      %s28 = int_to_ptr.hbm [resolvable:$true] %s27
      %s29 = sshll.u32 [#allocation4], 4
      %s30 = int_to_ptr.vmem [resolvable:$true] %s29
      %35 = dma.hbm_to_vmem [thread:$0]  %s28, 512, %s30, [#allocation5], 128, 128, 8
    $region9: #{tpu_custom_call.1} parent=1 // pred_fallthru
      _
    // Predicated region
    $region10: #{tpu_custom_call.1} parent=1 // pred_check
      _
    $region11: #{tpu_custom_call.1} parent=1 // pred_check_branch
      %37 = sbr.rel (0) target = $region13
    $region12: #{tpu_custom_call.1} parent=1 // pred_region
      _
    $region13: #{tpu_custom_call.1} parent=1 // pred_fallthru
      _
    // Predicated region
    $region14: #{tpu_custom_call.1} parent=1 // pred_check
      _
    $region15: #{tpu_custom_call.1} parent=1 // pred_check_branch
      %39 = sbr.rel (0) target = $region17
    $region16: #{tpu_custom_call.1} parent=1 // pred_region
      _
    $region17: #{tpu_custom_call.1} parent=1 // pred_fallthru
      _
    // Predicated region
    $region18: #{tpu_custom_call.1} parent=1 // pred_check
      _
    $region19: #{tpu_custom_call.1} parent=1 // pred_check_branch
      %41 = sbr.rel (0) target = $region21
    $region20: #{tpu_custom_call.1} parent=1 // pred_region
      _
    $region21: #{tpu_custom_call.1} parent=1 // pred_fallthru
      _
    // Predicated region
    $region22: #{tpu_custom_call.1} parent=1 // pred_check
      _
    $region23: #{tpu_custom_call.1} parent=1 // pred_check_branch
      %43 = sbr.rel (0) target = $region25
    $region24: #{tpu_custom_call.1} parent=1 // pred_region
      %45 = dma.done [#allocation3], 128
    $region25: #{tpu_custom_call.1} parent=1 // pred_fallthru
      _
    // Predicated region
    $region26: #{tpu_custom_call.1} parent=1 // pred_check
      _
    $region27: #{tpu_custom_call.1} parent=1 // pred_check_branch
      %47 = sbr.rel (0) target = $region29
    $region28: #{tpu_custom_call.1} parent=1 // pred_region
      %49 = dma.done [#allocation5], 512
    $region29: #{tpu_custom_call.1} parent=1 // pred_fallthru
      _
    %v50 = vld [vmem:[#allocation2] sm:$0xff]
    %v51 = vld [vmem:[%s4] sm:$0x1]
    %v52 = vld [vmem:[%s4 + $0x1] sm:$0x1]
    %v53 = vld [vmem:[#allocation4] sm:$0xff]
    %v54 = vld [vmem:[#allocation4 + $0x8] sm:$0xff]
    %v55 = vld [vmem:[#allocation4 + $0x10] sm:$0xff]
    %v56 = vld [vmem:[#allocation4 + $0x18] sm:$0xff]
    %v57 = vperm.slane %v51, 0
    %vm58 = vcmask 261120
    %v60 = vsel %vm58, %v50, 0
    %62 = vmatpush.msra.mxu0 0.0
    %63 = vmatpush.msra.mxu0 0.0
    %64 = vmatpush.msra.mxu0 0.0
    %65 = vmatpush.msra.mxu0 0.0
    %66 = vmatpush.msra.mxu0 0.0
    %67 = vmatpush.msra.mxu0 0.0
    %68 = vmatpush.msra.mxu0 0.0
    %69 = vmatpush.msra.mxu0 0.0
    %70 = vmatpush.msra.mxu0 0.0
    %71 = vmatpush.msra.mxu0 0.0
    %72 = vmatpush.msra.mxu0 0.0
    %73 = vmatpush.msra.mxu0 0.0
    %74 = vmatpush.msra.mxu0 %v56
    %75 = vmatpush.msra.mxu0 %v55
    %76 = vmatpush.msra.mxu0 %v54
    %77 = vmatpush.msra.mxu0 %v53
    %78 = vmatmul.f32.gmra.mxu0 %v60
    %v79 = vpop.f32.mrf.mxu0
    %v80 = vadd.f32 %v57, %v79
    %81 = vdwg.mxu0
    %v82 = vmul.f32 %v80, 0.5
    %v83 = vmul.f32 %v80, 0.70710677
    %vm84 = vcmp.ge.f32.partialorder %v83, 0.0
    %v85 = vsel %vm84, 1.0, -1.0
    %v86 = vand.u32 2147483647, %v83
    %v87 = vmul.f32 %v86, 0.3275911
    %v88 = vadd.f32 %v87, 1.0
    %v89 = vrcp.pop %v88
    %v90 = vmul.f32 %v88, %v89
    %v91 = vsub.f32 1.0, %v90
    %v92 = vmul.f32 %v89, %v91
    %v93 = vadd.f32 %v89, %v92
    %vm94 = vweird.f32 %v88
    %vm95 = vweird.f32 %v89
    %vm96 = vmor %vm94, %vm95
    %v97 = vsel %vm96, %v89, %v93
    %v98 = vand.u32 2147483647, %v88
    %vm99 = vcmp.eq.f32.partialorder %v98, 8.507059e+37
    %v100 = vand.u32 %v88, 2147483648
    %v101 = vor.u32 1.1754944e-38, %v100
    %v102 = vsel %vm99, %v101, %v97
    %v103 = vmul.f32 1.0, %v102
    %v104 = vmul.f32 %v103, 1.0614054
    %v105 = vadd.f32 %v104, -1.4531521
    %v106 = vmul.f32 %v105, %v103
    %v107 = vadd.f32 %v106, 1.4214138
    %v108 = vmul.f32 %v107, %v103
    %v109 = vadd.f32 %v108, -0.28449672
    %v110 = vmul.f32 %v109, %v103
    %v111 = vadd.f32 %v110, 0.2548296
    %v112 = vmul.f32 %v111, %v103
    %v113 = vsub.f32 0.0, %v86
    %v114 = vmul.f32 %v113, %v86
    %v115 = vmul.f32 %v114, 1.442695
    %v116 = vpow.pop %v115
    %v117 = vmul.f32 %v112, %v116
    %v118 = vsub.f32 1.0, %v117
    %v119 = vmul.f32 %v85, %v118
    %v120 = vadd.f32 %v119, 1.0
    %v121 = vmul.f32 %v82, %v120
    %vm122 = vcmask 531456
    %v123 = vsel %vm122, %v121, 0.0
    %v124 = vrot.slane %v123, 4
    %v125 = vadd.f32 %v123, %v124
    %v126 = vrot.slane %v125, 2
    %v127 = vadd.f32 %v125, %v126
    %v128 = vrot.slane %v127, 1
    %v129 = vadd.f32 %v127, %v128
    %v130 = vmul.f32 %v129, 0.125
    %v131 = vmul.f32 %v121, %v121
    %v132 = vsel %vm122, %v131, 0.0
    %v133 = vrot.slane %v132, 4
    %v134 = vadd.f32 %v132, %v133
    %v135 = vrot.slane %v134, 2
    %v136 = vadd.f32 %v134, %v135
    %v137 = vrot.slane %v136, 1
    %v138 = vadd.f32 %v136, %v137
    %v139 = vmul.f32 %v138, 0.125
    %v140 = vmul.f32 %v130, %v130
    %v141 = vsub.f32 %v139, %v140
    %v142 = vmax.f32 %v141, 0.0
    %v143 = vsub.f32 %v121, %v130
    %v144 = vadd.f32 %v142, 1e-05
    %v145 = vrsqrt.pop %v144
    %v146 = vmul.f32 %v145, %v144
    %v147 = vmul.f32 %v146, %v145
    %v148 = vmul.f32 0.5, %v147
    %v149 = vsub.f32 1.5, %v148
    %v150 = vmul.f32 %v145, %v149
    %vm151 = vweird.f32 %v144
    %vm152 = vweird.f32 %v145
    %vm153 = vmor %vm151, %vm152
    %v154 = vsel %vm153, %v145, %v150
    %v155 = vmul.f32 %v143, %v154
    %v156 = vlaneseq
    %v157 = vand.u32 %v156, 127
    %vm158 = vcmp.lt.s32.totalorder %v157, 64
    %v159 = vsel %vm158, 1, 0
    %vm160 = vcmp.eq.s32.totalorder %v159, 1
    %v161 = vsel %vm160, %v155, %v80
    %v162 = vld [vmem:[%s2] sm:$0xff]
    %v163 = vld [vmem:[%s2 + $0x8] sm:$0xff]
    %v164 = vld [vmem:[%s2 + $0x10] sm:$0xff]
    %v165 = vld [vmem:[%s2 + $0x18] sm:$0xff]
    %v166 = vld [vmem:[%s2 + $0x20] sm:$0xff]
    %v167 = vld [vmem:[%s2 + $0x28] sm:$0xff]
    %v168 = vld [vmem:[%s2 + $0x30] sm:$0xff]
    %v169 = vld [vmem:[%s2 + $0x38] sm:$0xff]
    %v170 = vld [vmem:[%s2 + $0x40] sm:$0x1]
    %v171 = vperm.slane %v52, 0
    %v173 = vsel %vm122, %v161, 0
    %vm175 = vcmask 1040384
    %v177 = vsel %vm175, %v170, 0
    %179 = vmatpush.msra.mxu0 0.0
    %180 = vmatpush.msra.mxu0 0.0
    %181 = vmatpush.msra.mxu0 0.0
    %182 = vmatpush.msra.mxu0 0.0
    %183 = vmatpush.msra.mxu0 0.0
    %184 = vmatpush.msra.mxu0 0.0
    %185 = vmatpush.msra.mxu0 0.0
    %186 = vmatpush.msra.mxu0 %v177
    %187 = vmatpush.msra.mxu0 %v169
    %188 = vmatpush.msra.mxu0 %v168
    %189 = vmatpush.msra.mxu0 %v167
    %190 = vmatpush.msra.mxu0 %v166
    %191 = vmatpush.msra.mxu0 %v165
    %192 = vmatpush.msra.mxu0 %v164
    %193 = vmatpush.msra.mxu0 %v163
    %194 = vmatpush.msra.mxu0 %v162
    %195 = vmatmul.f32.gmra.mxu0 %v173
    %v196 = vpop.f32.mrf.mxu0
    %v197 = vadd.f32 %v171, %v196
    %198 = vdwg.mxu0
    %v199 = vmul.f32 %v197, 0.5
    %v200 = vmul.f32 %v197, 0.70710677
    %vm201 = vcmp.ge.f32.partialorder %v200, 0.0
    %v202 = vsel %vm201, 1.0, -1.0
    %v203 = vand.u32 2147483647, %v200
    %v204 = vmul.f32 %v203, 0.3275911
    %v205 = vadd.f32 %v204, 1.0
    %v206 = vrcp.pop %v205
    %v207 = vmul.f32 %v205, %v206
    %v208 = vsub.f32 1.0, %v207
    %v209 = vmul.f32 %v206, %v208
    %v210 = vadd.f32 %v206, %v209
    %vm211 = vweird.f32 %v205
    %vm212 = vweird.f32 %v206
    %vm213 = vmor %vm211, %vm212
    %v214 = vsel %vm213, %v206, %v210
    %v215 = vand.u32 2147483647, %v205
    %vm216 = vcmp.eq.f32.partialorder %v215, 8.507059e+37
    %v217 = vand.u32 %v205, 2147483648
    %v218 = vor.u32 1.1754944e-38, %v217
    %v219 = vsel %vm216, %v218, %v214
    %v220 = vmul.f32 1.0, %v219
    %v221 = vmul.f32 %v220, 1.0614054
    %v222 = vadd.f32 %v221, -1.4531521
    %v223 = vmul.f32 %v222, %v220
    %v224 = vadd.f32 %v223, 1.4214138
    %v225 = vmul.f32 %v224, %v220
    %v226 = vadd.f32 %v225, -0.28449672
    %v227 = vmul.f32 %v226, %v220
    %v228 = vadd.f32 %v227, 0.2548296
    %v229 = vmul.f32 %v228, %v220
    %v230 = vsub.f32 0.0, %v203
    %v231 = vmul.f32 %v230, %v203
    %v232 = vmul.f32 %v231, 1.442695
    %v233 = vpow.pop %v232
    %v234 = vmul.f32 %v229, %v233
    %v235 = vsub.f32 1.0, %v234
    %v236 = vmul.f32 %v202, %v235
    %v237 = vadd.f32 %v236, 1.0
    %v238 = vmul.f32 %v199, %v237
    %v239 = vsel %vm122, %v238, 0.0
    %v240 = vrot.slane %v239, 4
    %v241 = vadd.f32 %v239, %v240
    %v242 = vrot.slane %v241, 2
    %v243 = vadd.f32 %v241, %v242
    %v244 = vrot.slane %v243, 1
    %v245 = vadd.f32 %v243, %v244
    %v246 = vmul.f32 %v245, 0.125
    %v247 = vmul.f32 %v238, %v238
    %v248 = vsel %vm122, %v247, 0.0
    %v249 = vrot.slane %v248, 4
    %v250 = vadd.f32 %v248, %v249
    %v251 = vrot.slane %v250, 2
    %v252 = vadd.f32 %v250, %v251
    %v253 = vrot.slane %v252, 1
    %v254 = vadd.f32 %v252, %v253
    %v255 = vmul.f32 %v254, 0.125
    %v256 = vmul.f32 %v246, %v246
    %v257 = vsub.f32 %v255, %v256
    %v258 = vmax.f32 %v257, 0.0
    %v259 = vsub.f32 %v238, %v246
    %v260 = vadd.f32 %v258, 1e-05
    %v261 = vrsqrt.pop %v260
    %v262 = vmul.f32 %v261, %v260
    %v263 = vmul.f32 %v262, %v261
    %v264 = vmul.f32 0.5, %v263
    %v265 = vsub.f32 1.5, %v264
    %v266 = vmul.f32 %v261, %v265
    %vm267 = vweird.f32 %v260
    %vm268 = vweird.f32 %v261
    %vm269 = vmor %vm267, %vm268
    %v270 = vsel %vm269, %v261, %v266
    %v271 = vmul.f32 %v259, %v270
    %v272 = vsel %vm160, %v271, %v197
    %v273 = vld [vmem:[%s3] sm:$0xff]
    %v274 = vld [vmem:[%s3 + $0x8] sm:$0xff]
    %v275 = vld [vmem:[%s3 + $0x10] sm:$0xff]
    %v276 = vld [vmem:[%s3 + $0x18] sm:$0xff]
    %v277 = vld [vmem:[%s3 + $0x20] sm:$0xff]
    %v278 = vld [vmem:[%s3 + $0x28] sm:$0xff]
    %v279 = vld [vmem:[%s3 + $0x30] sm:$0xff]
    %v280 = vld [vmem:[%s3 + $0x38] sm:$0xff]
    %v281 = vld [vmem:[%s3 + $0x40] sm:$0x1]
    %v283 = vsel %vm122, %v272, 0
    %v286 = vsel %vm175, %v281, 0
    %288 = vmatpush.msra.mxu0 0.0
    %289 = vmatpush.msra.mxu0 0.0
    %290 = vmatpush.msra.mxu0 0.0
    %291 = vmatpush.msra.mxu0 0.0
    %292 = vmatpush.msra.mxu0 0.0
    %293 = vmatpush.msra.mxu0 0.0
    %294 = vmatpush.msra.mxu0 0.0
    %295 = vmatpush.msra.mxu0 %v286
    %296 = vmatpush.msra.mxu0 %v280
    %297 = vmatpush.msra.mxu0 %v279
    %298 = vmatpush.msra.mxu0 %v278
    %299 = vmatpush.msra.mxu0 %v277
    %300 = vmatpush.msra.mxu0 %v276
    %301 = vmatpush.msra.mxu0 %v275
    %302 = vmatpush.msra.mxu0 %v274
    %303 = vmatpush.msra.mxu0 %v273
    %304 = vmatmul.f32.gmra.mxu0 %v283
    %v305 = vpop.f32.mrf.mxu0
    %v306 = vadd.f32 0.0, %v305
    %307 = vdwg.mxu0
    %vm308 = vcmask 7168
    %309 = vst.msk [vmem:[%s5] sm:$0xff] %vm308, %v306
    // Predicated region
    $region30: #{tpu_custom_call.1} parent=1 // pred_check
      _
    $region31: #{tpu_custom_call.1} parent=1 // pred_check_branch
      %311 = sbr.rel (0) target = $region33
    $region32: #{tpu_custom_call.1} parent=1 // pred_region
      _
    $region33: #{tpu_custom_call.1} parent=1 // pred_fallthru
      _
    // Predicated region
    $region34: #{tpu_custom_call.1} parent=1 // pred_check
      _
    $region35: #{tpu_custom_call.1} parent=1 // pred_check_branch
      %313 = sbr.rel (0) target = $region37
    $region36: #{tpu_custom_call.1} parent=1 // pred_region
      _
    $region37: #{tpu_custom_call.1} parent=1 // pred_fallthru
      _
    %314 = vsyncpa [#allocation3], 1
    %315 = vsyncpa [#allocation5], 1

</llo_original>
